<compile_context>
chip_gen: v5e
topology: v5e:2x2
jax: 0.10.0
libtpu: 0.0.40
codegen_flags: <defaults>
</compile_context>

<pallas_src>
import jax
import jax.numpy as jnp
from jax.experimental import pallas as pl
from jax.experimental.pallas import tpu as pltpu


# ----------------------------- small helpers (traced inside kernels) -----------------

def _silu(z):
    return z * jax.nn.sigmoid(z)


def _layernorm(z, w, b, eps=1e-5):
    mu = jnp.mean(z, axis=-1, keepdims=True)
    zc = z - mu
    var = jnp.mean(zc * zc, axis=-1, keepdims=True)
    return zc * jax.lax.rsqrt(var + eps) * w + b


def _dot(a, b):
    return jnp.dot(a, b, preferred_element_type=jnp.float32)


def _bdot(a, b):
    return jnp.dot(a.astype(jnp.bfloat16), b.astype(jnp.bfloat16),
                   preferred_element_type=jnp.float32)


def _linb(z, W, b):
    return _bdot(z, W) + b


# ----------------------------- input embedding kernel --------------------------------

def _embed_kernel(x_ref, w_ref, b_ref, o_ref):
    o_ref[...] = _linb(x_ref[...], w_ref[...], b_ref[...])


def linear_pallas(x, W, b):
    return pl.pallas_call(
        _embed_kernel,
        out_shape=jax.ShapeDtypeStruct((x.shape[0], W.shape[1]), jnp.float32),
        in_specs=[pl.BlockSpec(memory_space=pltpu.MemorySpace.VMEM)] * 3,
        out_specs=pl.BlockSpec(memory_space=pltpu.MemorySpace.VMEM),
    )(x, W, b)


# ----------------------------- one full EnTransformerLayer kernel --------------------

def make_layer_kernel(n_heads, dim_head, n_nodes, has_proj, n_params):
    H, D = n_heads, dim_head
    inv_scale = 1.0 / (D ** 0.5)
    inv_nm1 = 1.0 / max(n_nodes - 1, 1)
    NEG = -1e9

    def kernel(*refs):
        n_in = 7 + n_params
        h_ref, x_ref, S_ref, Gr_ref, Gc_ref, Dr_ref, msk_ref = refs[:7]
        p_refs = refs[7:n_in]
        ho_ref, xo_ref = refs[n_in], refs[n_in + 1]
        hn_s, q_s, k_s, v_s, gm_s, l_s, wv_s, co_s = refs[n_in + 2:]

        it = iter(p_refs)
        nx = lambda: next(it)[...]
        n1w, n1b = nx(), nx()
        qW, qb = nx(), nx()
        kW, kb = nx(), nx()
        vW, vb = nx(), nx()
        oW, ob = nx(), nx()
        pW1, pb1, pW2, pb2 = nx(), nx(), nx(), nx()
        eW1r, eW1c, eW1d, eb1 = nx(), nx(), nx(), nx()
        eW2, eb2 = nx(), nx()
        ewW, ewb = nx(), nx()
        mW1f, mW1a, mW1p, mb1 = nx(), nx(), nx(), nx()
        mW2, mb2 = nx(), nx()
        gW, gb = nx(), nx()
        cW1, cb1, cW2, cb2 = nx(), nx(), nx(), nx()
        cwts = nx()
        xW1, xb1, xW2, xb2 = nx(), nx(), nx(), nx()
        if has_proj:
            pjW, pjb = nx(), nx()
        fnw, fnb = nx(), nx()
        fW1, fb1, fW2, fb2 = nx(), nx(), nx(), nx()

        phase = pl.program_id(0)
        eb = pl.program_id(1)
        nb = pl.num_programs(1)

        # ---- once, at the very first grid step: node precompute + accumulator init ---
        @pl.when((phase == 0) & (eb == 0))
        def _init():
            h0 = h_ref[...]
            hn0 = _layernorm(h0, n1w, n1b)
            hn_s[...] = hn0
            q_s[...] = _linb(hn0, qW, qb)
            k_s[...] = _linb(hn0, kW, kb)
            v_s[...] = _linb(hn0, vW, vb)
            gm_s[...] = jnp.full(gm_s.shape, NEG, jnp.float32)
            l_s[...] = jnp.zeros(l_s.shape, jnp.float32)
            wv_s[...] = jnp.zeros(wv_s.shape, jnp.float32)
            co_s[...] = jnp.zeros(co_s.shape, jnp.float32)

        # ---- per-edge-block quantities shared by both phases --------------------------
        Gr = Gr_ref[...]                       # [T, N] bf16 one-hot gather (row)
        Gc = Gc_ref[...]                       # [T, N] bf16 one-hot gather (col)
        S = S_ref[...]                         # [N, T] bf16 scatter (= Gr.T slice)
        msk = msk_ref[...]                     # [T, 1] f32, 0 for masked / padded edges
        x = x_ref[...]                         # [N, 3]
        hn = hn_s[...]                         # [N, F]
        Grf = Gr.astype(jnp.float32)
        Gcf = Gc.astype(jnp.float32)

        rel_pos = _dot(Grf - Gcf, x)                                    # [T, 3]
        rel_dist = jnp.sum(rel_pos * rel_pos, axis=-1, keepdims=True)   # [T, 1]

        h_row, h_col = _bdot(Gr, hn), _bdot(Gc, hn)                     # [T, F]
        # pos_mlp layer 1 has K=1: do it as a VPU outer product, not an MXU pass.
        pos_enc = _linb(_silu(rel_dist * pW1 + pb1), pW2, pb2)          # [T, H]
        # edge_mlp layer 1: (2F+1)-wide concat split into lane-aligned matmuls + rank-1.
        e1 = _bdot(h_row, eW1r) + _bdot(h_col, eW1c) + rel_dist * eW1d + eb1
        edge_feat = _linb(_silu(e1), eW2, eb2)                          # [T, hid]
        edge_w = _linb(edge_feat, ewW, ewb)                             # [T, H]

        q_row = _bdot(Gr, q_s[...])                                     # [T, H*D]
        k_col = _bdot(Gc, k_s[...])                                     # [T, H*D]
        # per-head dot product via a block-diagonal reduction matrix [H*D, H]
        B = (jax.lax.broadcasted_iota(jnp.int32, (H * D, H), 0) // D
             == jax.lax.broadcasted_iota(jnp.int32, (H * D, H), 1)).astype(jnp.float32)
        score = _dot(q_row * k_col, B) * inv_scale + pos_enc + edge_w   # [T, H]
        score = jnp.where(msk > 0.0, score, NEG)

        # ---- phase 0: online softmax statistics ---------------------------------------
        @pl.when(phase == 0)
        def _stats():
            # TODO(synk): reference uses a per-destination-node scatter_max; here we
            # keep a running per-head global max (scores are clamped to -1e9 so exp
            # cannot overflow).  Softmax is exact up to the +1e-8 epsilon scaling and
            # the [N, E, H] scatter-max broadcast is avoided entirely.
            gm_old = gm_s[...]                                          # [1, H]
            gm_new = jnp.maximum(gm_old, jnp.max(score, axis=0, keepdims=True))
            alpha = jnp.exp(gm_old - gm_new)                            # [1, H]
            e_blk = jnp.exp(score - gm_new)                             # [T, H]
            l_s[...] = l_s[...] * alpha + _dot(S.astype(jnp.float32), e_blk)
            gm_s[...] = gm_new

        # ---- phase 1: attention, messages, coord + value accumulation ------------------
        @pl.when(phase == 1)
        def _accum():
            gm = gm_s[...]
            e = jnp.exp(score - gm)                                     # [T, H]
            denom = _dot(Grf, l_s[...]) + 1e-8                          # [T, H]
            attn = e * pl.reciprocal(denom, approx=True)                # [T, H]
            attn_mean = jnp.mean(attn, axis=-1, keepdims=True)          # [T, 1]

            # msg_mlp layer 1: (hid+4)-wide concat split into matmul + rank-1/rank-3 VPU.
            m1 = (_bdot(edge_feat, mW1f) + attn_mean * mW1a
                  + rel_pos[:, 0:1] * mW1p[0:1, :]
                  + rel_pos[:, 1:2] * mW1p[1:2, :]
                  + rel_pos[:, 2:3] * mW1p[2:3, :] + mb1)
            messages = _linb(_silu(m1), mW2, mb2)                       # [T, hid]

            gates = jax.nn.sigmoid(_linb(messages, gW, gb))             # [T, H]
            coordw = _linb(_silu(_linb(messages, cW1, cb1)), cW2, cb2)  # [T, H]
            we = jnp.sum(gates * coordw * cwts, axis=-1, keepdims=True)  # [T, 1]

            # cross-product term; rp_roll comes from the pre-rolled (Gr - Gc) matrix so
            # there is no O(E^2) permutation matmul and no cross-block roll to handle.
            rp_roll = _dot(Dr_ref[...].astype(jnp.float32), x)          # [T, 3]
            cx = rel_pos[:, 1:2] * rp_roll[:, 2:3] - rel_pos[:, 2:3] * rp_roll[:, 1:2]
            cy = rel_pos[:, 2:3] * rp_roll[:, 0:1] - rel_pos[:, 0:1] * rp_roll[:, 2:3]
            cz = rel_pos[:, 0:1] * rp_roll[:, 1:2] - rel_pos[:, 1:2] * rp_roll[:, 0:1]
            cross_vec = jnp.concatenate([cx, cy, cz], axis=-1)          # [T, 3]
            cross_g = _linb(_silu(_linb(messages, xW1, xb1)), xW2, xb2)  # [T, H]
            cg = jnp.sum(cross_g, axis=-1, keepdims=True)               # [T, 1]

            upd = (we * rel_pos + cg * cross_vec) * inv_nm1             # [T, 3]
            co_s[...] = co_s[...] + _dot(S.astype(jnp.float32), upd)    # [N, 3]

            # per-head value aggregation: expand attn to [T, H*D], scatter-sum to nodes.
            BT = (jax.lax.broadcasted_iota(jnp.int32, (H, H * D), 1) // D
                  == jax.lax.broadcasted_iota(jnp.int32, (H, H * D), 0)).astype(jnp.float32)
            v_col = _bdot(Gc, v_s[...])                                 # [T, H*D]
            attn_exp = _dot(attn, BT)                                   # [T, H*D]
            wv_s[...] = wv_s[...] + _bdot(S, attn_exp * v_col)          # [N, H*D]

        # ---- finalize: residual + feed-forward on the very last grid step --------------
        @pl.when((phase == 1) & (eb == nb - 1))
        def _finalize():
            h = h_ref[...]
            h_attn = _linb(wv_s[...], oW, ob)                           # [N, out_f]
            # TODO(synk): nn.Dropout(0.1) treated as identity (eval mode).
            if has_proj:
                h_res = _linb(h, pjW, pjb) + h_attn
            else:
                h_res = h + h_attn
            ff = _linb(_silu(_linb(_layernorm(h_res, fnw, fnb), fW1, fb1)), fW2, fb2)
            ho_ref[...] = h_res + ff
            x_new = x + co_s[...]
            # lane-pad the coordinate output; wrapper slices back to (N, 3).
            xo_ref[...] = jnp.concatenate(
                [x_new, jnp.zeros((x_new.shape[0], 5), jnp.float32)], axis=-1)

    return kernel


def layer_pallas(h, x, S, Gr, Gc, Dr, msk, layer_params, n_heads, dim_head, tile_e):
    N, F_in = h.shape
    E_pad = Gr.shape[0]
    n_blocks = E_pad // tile_e
    out_nf = layer_params["out_nf"]
    has_proj = layer_params["has_proj"]
    flat = list(layer_params["flat"])
    HD = n_heads * dim_head
    kernel = make_layer_kernel(n_heads, dim_head, N, has_proj, len(flat))

    const = lambda shape: pl.BlockSpec(shape, lambda i, j: (0, 0))
    in_specs = (
        [const((N, F_in)),                                     # h (resident)
         const((N, 3)),                                        # x (resident)
         pl.BlockSpec((N, tile_e), lambda i, j: (0, j)),       # S  (scatter, edge tiled)
         pl.BlockSpec((tile_e, N), lambda i, j: (j, 0)),       # Gr (gather,  edge tiled)
         pl.BlockSpec((tile_e, N), lambda i, j: (j, 0)),       # Gc
         pl.BlockSpec((tile_e, N), lambda i, j: (j, 0)),       # Dr (rolled Gr - Gc)
         pl.BlockSpec((tile_e, 1), lambda i, j: (j, 0))]       # edge mask
        + [const(prm.shape) for prm in flat])                  # weights (resident)

    grid_spec = pltpu.PrefetchScalarGridSpec(
        num_scalar_prefetch=0,
        grid=(2, n_blocks),                                    # (phase, edge block)
        in_specs=in_specs,
        out_specs=[const((N, out_nf)), const((N, 8))],
        scratch_shapes=[
            pltpu.VMEM((N, F_in), jnp.float32),                # layer-normed features
            pltpu.VMEM((N, HD), jnp.float32),                  # q
            pltpu.VMEM((N, HD), jnp.float32),                  # k
            pltpu.VMEM((N, HD), jnp.float32),                  # v
            pltpu.VMEM((1, n_heads), jnp.float32),             # running per-head max
            pltpu.VMEM((N, n_heads), jnp.float32),             # softmax denominators
            pltpu.VMEM((N, HD), jnp.float32),                  # weighted-value accum
            pltpu.VMEM((N, 3), jnp.float32),                   # coord-update accum
        ])

    ho, xo = pl.pallas_call(
        kernel,
        out_shape=(jax.ShapeDtypeStruct((N, out_nf), jnp.float32),
                   jax.ShapeDtypeStruct((N, 8), jnp.float32)),
        grid_spec=grid_spec,
        compiler_params=pltpu.CompilerParams(
            dimension_semantics=("arbitrary", "arbitrary"),
            vmem_limit_bytes=48 * 1024 * 1024),
    )(h, x, S, Gr, Gc, Dr, msk, *flat)
    return ho, xo[:, :3]


# ----------------------------- full EnTransformer forward ----------------------------

def en_transformer_forward(params, h, x, row, col, mask, n_heads, dim_head, tile_e=128):
    N = h.shape[0]
    E = row.shape[0]
    n_blocks = max(1, -(-E // tile_e))        # tile_e must be a multiple of 128
    E_pad = n_blocks * tile_e

    def one_hot_pad(idx):
        oh = jax.nn.one_hot(idx, N, dtype=jnp.float32)
        return jnp.pad(oh, ((0, E_pad - E), (0, 0)))

    Gr = one_hot_pad(row)                                     # [E_pad, N]
    Gc = one_hot_pad(col)
    # pre-rolled difference matrix: dot(Dr, x) == (x[row]-x[col]).roll(1, 0)
    Dr = one_hot_pad(jnp.roll(row, 1)) - one_hot_pad(jnp.roll(col, 1))
    S = Gr.T                                                  # [N, E_pad]
    if mask is None:
        m_real = jnp.ones((E, 1), jnp.float32)
    else:
        m_real = mask.reshape(E, 1).astype(jnp.float32)
    msk = jnp.pad(m_real, ((0, E_pad - E), (0, 0)))           # padded edges masked out

    # 0 / +-1 gather-scatter matrices are exact in bf16: halve their HBM/VMEM traffic.
    Gr, Gc, Dr, S = (a.astype(jnp.bfloat16) for a in (Gr, Gc, Dr, S))

    h = linear_pallas(h.astype(jnp.float32), params["emb_W"], params["emb_b"])
    x = x.astype(jnp.float32)
    # TODO(synk): layers run as separate pallas_calls; fusing them (stacked weights +
    # a layer grid axis) would avoid re-staging the static graph matrices per layer.
    for lp in params["layers"]:
        h, x = layer_pallas(h, x, S, Gr, Gc, Dr, msk, lp, n_heads, dim_head, tile_e)
    return h, x


# ----------------------------- deterministic parameter init --------------------------

def _init_linear(key, fan_in, fan_out, scale=0.1):
    k1, k2 = jax.random.split(key)
    W = jax.random.normal(k1, (fan_in, fan_out), jnp.float32) * scale
    b = jax.random.normal(k2, (1, fan_out), jnp.float32) * scale
    return W, b


def _init_layer(key, in_f, out_f, hid, H, D):
    ks = iter(jax.random.split(key, 32))
    lin = lambda fi, fo: _init_linear(next(ks), fi, fo)
    flat = []
    flat += [jnp.ones((1, in_f), jnp.float32), jnp.zeros((1, in_f), jnp.float32)]  # norm1
    for _ in range(3):                                   # to_q, to_k, to_v
        W, b = lin(in_f, H * D); flat += [W, b]
    W, b = lin(H * D, out_f); flat += [W, b]             # to_out
    W, b = lin(1, hid // 2); flat += [W, b]              # pos_mlp layer 1
    W, b = lin(hid // 2, H); flat += [W, b]              # pos_mlp layer 2
    W, b = lin(2 * in_f + 1, hid)                        # edge_mlp layer 1 (split rows)
    flat += [W[:in_f], W[in_f:2 * in_f], W[2 * in_f:], b]
    W, b = lin(hid, hid); flat += [W, b]                 # edge_mlp layer 2
    W, b = lin(hid, H); flat += [W, b]                   # edge_weight
    W, b = lin(hid + 4, hid)                             # msg_mlp layer 1 (split rows)
    flat += [W[:hid], W[hid:hid + 1], W[hid + 1:], b]
    W, b = lin(hid, hid); flat += [W, b]                 # msg_mlp layer 2
    W, b = lin(hid, H); flat += [W, b]                   # gate_mlp (sigmoid in kernel)
    W, b = lin(hid, hid); flat += [W, b]                 # coord_mlp layer 1
    W, b = lin(hid, H); flat += [W, b]                   # coord_mlp layer 2
    flat += [jnp.ones((1, H), jnp.float32)]              # coord_weights
    W, b = lin(hid, hid); flat += [W, b]                 # cross_mlp layer 1
    W, b = lin(hid, H); flat += [W, b]                   # cross_mlp layer 2
    has_proj = in_f != out_f
    if has_proj:                                         # proj (Identity otherwise)
        W, b = lin(in_f, out_f); flat += [W, b]
    flat += [jnp.ones((1, out_f), jnp.float32), jnp.zeros((1, out_f), jnp.float32)]  # ff LN
    W, b = lin(out_f, hid * 2); flat += [W, b]           # ff linear 1
    W, b = lin(hid * 2, out_f); flat += [W, b]           # ff linear 2
    return {"flat": flat, "out_nf": out_f, "has_proj": has_proj}


def init_params(key, input_nf, output_nf, hidden_nf, n_layers, n_heads, dim_head):
    keys = jax.random.split(key, 1 + n_layers)
    emb_W, emb_b = _init_linear(keys[0], input_nf, hidden_nf)
    layers = []
    for i in range(n_layers):
        out_f = hidden_nf if i < n_layers - 1 else output_nf
        layers.append(_init_layer(keys[1 + i], hidden_nf, out_f, hidden_nf,
                                  n_heads, dim_head))
    return {"emb_W": emb_W, "emb_b": emb_b, "layers": layers}


# ----------------------------- demo ---------------------------------------------------

if __name__ == "__main__":
    N_NODES, INPUT_NF, HIDDEN_NF, OUTPUT_NF = 12, 8, 32, 16
    N_LAYERS, N_HEADS, DIM_HEAD = 2, 4, 16

    key = jax.random.PRNGKey(0)
    kh, kx, kp = jax.random.split(key, 3)
    h = jax.random.normal(kh, (N_NODES, INPUT_NF), jnp.float32)
    x = jax.random.normal(kx, (N_NODES, 3), jnp.float32)

    # fully-connected graph without self loops: E = N*(N-1) = 132 edges (-> 2 edge blocks)
    rows, cols = [], []
    for i in range(N_NODES):
        for j in range(N_NODES):
            if i != j:
                rows.append(i)
                cols.append(j)
    row = jnp.array(rows, jnp.int32)
    col = jnp.array(cols, jnp.int32)

    params = init_params(kp, INPUT_NF, OUTPUT_NF, HIDDEN_NF,
                         N_LAYERS, N_HEADS, DIM_HEAD)

    h_out, x_out = en_transformer_forward(params, h, x, row, col, mask=None,
                                          n_heads=N_HEADS, dim_head=DIM_HEAD,
                                          tile_e=128)
    jax.block_until_ready((h_out, x_out))

    assert h_out.shape == (N_NODES, OUTPUT_NF)
    assert x_out.shape == (N_NODES, 3)
    assert bool(jnp.all(jnp.isfinite(h_out))) and bool(jnp.all(jnp.isfinite(x_out)))
    print("KERNEL_OK")
</pallas_src>

<mosaic_0001>
module attributes {stable_mosaic.version = 11 : i64} {
  func.func @_embed_kernel(%arg0: memref<12x8xf32, #tpu.memory_space<vmem>>, %arg1: memref<8x32xf32, #tpu.memory_space<vmem>>, %arg2: memref<1x32xf32, #tpu.memory_space<vmem>>, %arg3: memref<12x32xf32, #tpu.memory_space<vmem>>) attributes {dimension_semantics = [], scalar_prefetch = 0 : i64, scratch_operands = 0 : i64, tpu.core_type = #tpu.core_type<tc>} {
    %c0 = arith.constant 0 : index
    %c0_0 = arith.constant 0 : index
    %0 = vector.load %arg0[%c0, %c0_0] : memref<12x8xf32, #tpu.memory_space<vmem>>, vector<12x8xf32>
    %c0_1 = arith.constant 0 : index
    %c0_2 = arith.constant 0 : index
    %1 = vector.load %arg1[%c0_1, %c0_2] : memref<8x32xf32, #tpu.memory_space<vmem>>, vector<8x32xf32>
    %c0_3 = arith.constant 0 : index
    %c0_4 = arith.constant 0 : index
    %2 = vector.load %arg2[%c0_3, %c0_4] : memref<1x32xf32, #tpu.memory_space<vmem>>, vector<1x32xf32>
    %3 = arith.truncf %0 : vector<12x8xf32> to vector<12x8xbf16>
    %4 = arith.truncf %1 : vector<8x32xf32> to vector<8x32xbf16>
    %cst = arith.constant dense<0.000000e+00> : vector<12x32xf32>
    %5 = tpu.matmul %3, %4, %cst {dimension_numbers = #tpu.dot_dimension_numbers<[1], [0], [0], [1], [0, 0, 1, 1], [], []>} : vector<12x8xbf16>, vector<8x32xbf16>, vector<12x32xf32> -> vector<12x32xf32>
    %6 = vector.broadcast %2 : vector<1x32xf32> to vector<12x32xf32>
    %7 = arith.addf %5, %6 : vector<12x32xf32>
    %c0_5 = arith.constant 0 : index
    %c0_6 = arith.constant 0 : index
    %8 = vector.load %arg3[%c0_5, %c0_6] : memref<12x32xf32, #tpu.memory_space<vmem>>, vector<12x32xf32>
    tpu.vector_store %arg3[%c0_5, %c0_6], %7 {strides = array<i32>} : memref<12x32xf32, #tpu.memory_space<vmem>>, vector<12x32xf32>,
    return
  }
}

</mosaic_0001>

<llo_original>
// kernel: tpu_custom_call.1
$region0: #{tpu_custom_call.1}
  #allocation0 [shape = 'u32[]', space=smem, size = 0x4, offset = 0x4, fixed_abs, tag = 'smem constant byte address 0x4 - core index']
  #allocation1 [shape = 'u32[72,128]{1,0:T(1,128)}', space=vmem, size = 0x9000, scoped, tag = 'internal scratch']
  %s0 = inlined_call_operand.vmem [shape: f32[12,8], index: 0, kind: input, shape index: {}]
  %s1 = inlined_call_operand.vmem [shape: f32[8,32], index: 1, kind: input, shape index: {}]
  %s2 = inlined_call_operand.vmem [shape: f32[1,32], index: 2, kind: input, shape index: {}]
  %s3 = inlined_call_operand.hbm [shape: f32[12,32], index: 3, kind: output, shape index: {}]
  %s4 = sld [smem:[#allocation0]]
  $region22: #{tpu_custom_call.1} parent=0
    _
  %s6 = ssub.s32 1, %s4
  %s7 = scalar_select 0, %s6, %s4
  $region1: #{tpu_custom_call.1} parent=0
    #allocation2 [shape = 'u8[8192]{0}', space=vmem, size = 0x2000, scoped, tag = 'output window, operand 0, single buffered']
    #allocation3 [shape = 's32[1]{0}', space=sflag, size = 0x4, scoped, tag = 'scoped memory for tpu_custom_call.1']
    %8 = vsyncpa [#allocation3], 0
    // Predicated region
    $region2: #{tpu_custom_call.1} parent=1 // pred_check
      _
    $region3: #{tpu_custom_call.1} parent=1 // pred_check_branch
      %10 = sbr.rel (0) target = $region5
    $region4: #{tpu_custom_call.1} parent=1 // pred_region
      _
    $region5: #{tpu_custom_call.1} parent=1 // pred_fallthru
      _
    // Predicated region
    $region6: #{tpu_custom_call.1} parent=1 // pred_check
      _
    $region7: #{tpu_custom_call.1} parent=1 // pred_check_branch
      %12 = sbr.rel (0) target = $region9
    $region8: #{tpu_custom_call.1} parent=1 // pred_region
      _
    $region9: #{tpu_custom_call.1} parent=1 // pred_fallthru
      _
    // Predicated region
    $region10: #{tpu_custom_call.1} parent=1 // pred_check
      _
    $region11: #{tpu_custom_call.1} parent=1 // pred_check_branch
      %14 = sbr.rel (0) target = $region13
    $region12: #{tpu_custom_call.1} parent=1 // pred_region
      _
    $region13: #{tpu_custom_call.1} parent=1 // pred_fallthru
      _
    %v16 = vld [vmem:[%s0] sm:$0xff]
    %v17 = vld [vmem:[%s0 + $0x8] sm:$0xf]
    %v18 = vld [vmem:[%s1] sm:$0xff]
    %v19 = vld [vmem:[%s2] sm:$0x1]
    %v20 = vpack.c.bf16 %v17, %v16
    %v21 = vpack.c.bf16 %v18, %v18
    %v23 = vperm.slane %v19, 0
    %vm25 = vcmask 64512
    %v27 = vsel %vm25, %v20, 0
    %vm29 = vcmask 1043456
    %v31 = vsel %vm29, %v21, 0
    %33 = vmatpush.bf16.msra.mxu0 0
    %34 = vmatpush.bf16.msra.mxu0 0
    %35 = vmatpush.bf16.msra.mxu0 0
    %36 = vmatpush.bf16.msra.mxu0 0
    %37 = vmatpush.bf16.msra.mxu0 0
    %38 = vmatpush.bf16.msra.mxu0 0
    %39 = vmatpush.bf16.msra.mxu0 0
    %40 = vmatpush.bf16.msra.mxu0 %v31
    %41 = vmatmul.bf16.gmra.mxu0 %v27
    %v42 = vpop.f32.mrf.mxu0
    %v43 = vadd.f32 %v23, %v42
    %v44 = vpop.f32.mrf.mxu0
    %v45 = vadd.f32 %v23, %v44
    %46 = vdwg.mxu0
    %vm47 = vcmask 261120
    %48 = vst.msk [vmem:[#allocation2] sm:$0xff] %vm47, %v43
    %vm49 = vcmask 257024
    %50 = vst.msk [vmem:[#allocation2 + $0x8] sm:$0xf] %vm49, %v45
    // Predicated region
    $region14: #{tpu_custom_call.1} parent=1 // pred_check
      _
    $region15: #{tpu_custom_call.1} parent=1 // pred_check_branch
      %52 = sbr.rel (0) target = $region17
    $region16: #{tpu_custom_call.1} parent=1 // pred_region
      %54 = vsyncadd [#allocation3], 0
      %s55 = sshll.u32 [#allocation2], 4
      %s56 = int_to_ptr.vmem [resolvable:$true] %s55
      %s57 = sshll.u32 %s3, 4
      %s58 = int_to_ptr.hbm [resolvable:$true] %s57
      %63 = dma.vmem_to_hbm [thread:$0]  %s56, 256, %s58, [#allocation3], 128, 128, 8
    $region17: #{tpu_custom_call.1} parent=1 // pred_fallthru
      _
    // Predicated region
    $region18: #{tpu_custom_call.1} parent=1 // pred_check
      _
    $region19: #{tpu_custom_call.1} parent=1 // pred_check_branch
      %65 = sbr.rel (0) target = $region21
    $region20: #{tpu_custom_call.1} parent=1 // pred_region
      %67 = dma.done [#allocation3], 256
    $region21: #{tpu_custom_call.1} parent=1 // pred_fallthru
      _
    %68 = vsyncpa [#allocation3], 1

</llo_original>
